<compile_context>
chip_gen: v6e
topology: v6e:2x2x1
jax: 0.10.0
libtpu: 0.0.40
codegen_flags: <defaults>
</compile_context>

<pallas_src>
import functools

import numpy as np
import jax
import jax.numpy as jnp
from jax.experimental import pallas as pl
from jax.experimental.pallas import tpu as pltpu

_LANE = 128
_SUBLANE = 8


def _round_up(x, m):
    return (x + m - 1) // m * m


def _dqnet_kernel(x_ref, w1_ref, b1_ref, w2_ref, b2_ref, w3_ref, b3_ref, o_ref,
                  *, in_dim, use_fma_l1):
    x = x_ref[...]  # (TB, in_dim) f32

    # ---- Layer 1: Linear + ReLU -------------------------------------------------
    if use_fma_l1:
        # K is tiny (e.g. 4): a few VPU broadcast-FMAs beat an MXU pass that would
        # waste 124/128 lanes, and the math stays exact f32.
        w1 = w1_ref[...]                       # (in_dim, hidden) f32
        h1 = x[:, 0:1] * w1[0:1, :] + b1_ref[...]
        for k in range(1, in_dim):
            h1 = h1 + x[:, k:k + 1] * w1[k:k + 1, :]
    else:
        h1 = jnp.dot(x.astype(jnp.bfloat16), w1_ref[...],
                     preferred_element_type=jnp.float32) + b1_ref[...]
    h1 = jnp.maximum(h1, 0.0)

    # ---- Layer 2: Linear + ReLU (bf16 in, f32 accumulate) ------------------------
    h2 = jnp.dot(h1.astype(jnp.bfloat16), w2_ref[...],
                 preferred_element_type=jnp.float32) + b2_ref[...]
    h2 = jnp.maximum(h2, 0.0)

    # ---- Layer 3: Linear (Q-values, lane-padded to 128) --------------------------
    o_ref[...] = jnp.dot(h2.astype(jnp.bfloat16), w3_ref[...],
                         preferred_element_type=jnp.float32) + b3_ref[...]


def dqnet_forward(obs, params, state=None, *, block_b=512):
    """Mirrors DQNet.forward: returns (q_values, state)."""
    w1, b1, w2, b2, w3, b3 = params
    obs = jnp.asarray(obs, dtype=jnp.float32)
    if obs.ndim == 1:
        obs = obs[None, :]

    B, in_dim = obs.shape
    hidden = w1.shape[1]
    out_dim = w3.shape[1]
    out_pad = _round_up(out_dim, _LANE)

    use_fma_l1 = in_dim <= 16  # tiny-K first layer -> VPU FMAs, else MXU dot in bf16

    # MXU operands in bf16 (f32 accumulation inside the kernel); biases stay f32.
    w1_c = w1 if use_fma_l1 else w1.astype(jnp.bfloat16)
    w2_c = w2.astype(jnp.bfloat16)
    w3_p = jnp.zeros((hidden, out_pad), jnp.bfloat16).at[:, :out_dim].set(
        w3.astype(jnp.bfloat16))
    b3_p = jnp.zeros((1, out_pad), jnp.float32).at[:, :out_dim].set(b3)

    # Batch tiling: largest tile <= block_b (default 512 keeps v5e's 16 MiB scoped
    # VMEM comfortable), pad B up to a multiple of it.
    tb = min(block_b, _round_up(B, _SUBLANE))
    b_pad = _round_up(B, tb)
    if b_pad != B:
        obs = jnp.pad(obs, ((0, b_pad - B), (0, 0)))
    grid = (b_pad // tb,)

    flops = 2 * b_pad * (in_dim * hidden + hidden * hidden + hidden * out_pad)
    bytes_accessed = (
        obs.size * 4
        + w1_c.size * w1_c.dtype.itemsize + b1.size * 4
        + w2_c.size * 2 + b2.size * 4
        + w3_p.size * 2 + b3_p.size * 4
        + b_pad * out_pad * 4
    )

    kernel = functools.partial(_dqnet_kernel, in_dim=in_dim, use_fma_l1=use_fma_l1)

    q = pl.pallas_call(
        kernel,
        out_shape=jax.ShapeDtypeStruct((b_pad, out_pad), jnp.float32),
        grid_spec=pltpu.PrefetchScalarGridSpec(
            num_scalar_prefetch=0,
            grid=grid,
            in_specs=[
                pl.BlockSpec((tb, in_dim), lambda i: (i, 0)),        # obs tile (pipelined)
                pl.BlockSpec((in_dim, hidden), lambda i: (0, 0)),    # w1 (resident)
                pl.BlockSpec((1, hidden), lambda i: (0, 0)),         # b1
                pl.BlockSpec((hidden, hidden), lambda i: (0, 0)),    # w2 (bf16, resident)
                pl.BlockSpec((1, hidden), lambda i: (0, 0)),         # b2
                pl.BlockSpec((hidden, out_pad), lambda i: (0, 0)),   # w3 (bf16, lane-padded)
                pl.BlockSpec((1, out_pad), lambda i: (0, 0)),        # b3 (lane-padded)
            ],
            out_specs=pl.BlockSpec((tb, out_pad), lambda i: (i, 0)),  # lane-dense output
        ),
        compiler_params=pltpu.CompilerParams(
            dimension_semantics=("parallel",),
        ),
        cost_estimate=pl.CostEstimate(
            flops=flops, transcendentals=0, bytes_accessed=bytes_accessed),
    )(obs, w1_c, b1, w2_c, b2, w3_p, b3_p)

    return q[:B, :out_dim], state


def init_dqnet_params(key, state_shape, action_shape, hidden=128):
    """Deterministic init matching PyTorch nn.Linear default (uniform +-1/sqrt(fan_in)).
    Weights are stored as (in_features, out_features); biases as (1, out_features)."""
    in_dim = int(np.prod(state_shape))
    out_dim = int(np.prod(action_shape))
    dims = [(in_dim, hidden), (hidden, hidden), (hidden, out_dim)]
    params = []
    for (fan_in, fan_out) in dims:
        key, kw, kb = jax.random.split(key, 3)
        bound = 1.0 / np.sqrt(fan_in)
        w = jax.random.uniform(kw, (fan_in, fan_out), jnp.float32, -bound, bound)
        b = jax.random.uniform(kb, (1, fan_out), jnp.float32, -bound, bound)
        params += [w, b]
    return tuple(params)


def _reference(obs, params):
    w1, b1, w2, b2, w3, b3 = params
    h = jnp.maximum(obs @ w1 + b1, 0.0)
    h = jnp.maximum(h @ w2 + b2, 0.0)
    return h @ w3 + b3


if __name__ == "__main__":
    key = jax.random.PRNGKey(0)

    state_shape = (4,)
    action_shape = (2,)
    in_dim = int(np.prod(state_shape))
    out_dim = int(np.prod(action_shape))

    key, kp, kx1, kx2 = jax.random.split(key, 4)
    params = init_dqnet_params(kp, state_shape, action_shape, hidden=128)

    # Small-batch path (single grid step).
    obs_small = jax.random.normal(kx1, (8, in_dim), dtype=jnp.float32)
    q_small, state = dqnet_forward(obs_small, params, state=None)
    q_small = jax.block_until_ready(q_small)
    ref_small = _reference(obs_small, params)
    assert q_small.shape == (8, out_dim)
    assert state is None
    # bf16 matmul operands with f32 accumulation -> loosened tolerance vs f32 reference.
    assert jnp.allclose(q_small, ref_small, atol=2e-2, rtol=2e-2), (
        float(jnp.max(jnp.abs(q_small - ref_small))))

    # Larger, non-multiple batch to exercise the batch grid + tail padding.
    obs_big = jax.random.normal(kx2, (1040, in_dim), dtype=jnp.float32)
    q_big, _ = dqnet_forward(obs_big, params, state=None)
    q_big = jax.block_until_ready(q_big)
    ref_big = _reference(obs_big, params)
    assert q_big.shape == (1040, out_dim)
    assert jnp.allclose(q_big, ref_big, atol=2e-2, rtol=2e-2), (
        float(jnp.max(jnp.abs(q_big - ref_big))))

    print("KERNEL_OK")
</pallas_src>

<mosaic_0001>
module attributes {stable_mosaic.version = 11 : i64} {
  func.func @_dqnet_kernel(%arg0: i32, %arg1: memref<8x4xf32, #tpu.memory_space<vmem>>, %arg2: memref<4x128xf32, #tpu.memory_space<vmem>>, %arg3: memref<1x128xf32, #tpu.memory_space<vmem>>, %arg4: memref<128x128xbf16, #tpu.memory_space<vmem>>, %arg5: memref<1x128xf32, #tpu.memory_space<vmem>>, %arg6: memref<128x128xbf16, #tpu.memory_space<vmem>>, %arg7: memref<1x128xf32, #tpu.memory_space<vmem>>, %arg8: memref<8x128xf32, #tpu.memory_space<vmem>>) attributes {dimension_semantics = [#tpu.dimension_semantics<parallel>], iteration_bounds = array<i64: 1>, scalar_prefetch = 0 : i64, scratch_operands = 0 : i64, tpu.core_type = #tpu.core_type<tc>, window_params = [{transform_indices = @transform_0, window_bounds = array<i64: 8, 4>}, {pipeline_mode = #tpu.pipeline_mode<synchronous>, transform_indices = @transform_1, window_bounds = array<i64: 4, 128>}, {pipeline_mode = #tpu.pipeline_mode<synchronous>, transform_indices = @transform_2, window_bounds = array<i64: 1, 128>}, {pipeline_mode = #tpu.pipeline_mode<synchronous>, transform_indices = @transform_3, window_bounds = array<i64: 128, 128>}, {pipeline_mode = #tpu.pipeline_mode<synchronous>, transform_indices = @transform_4, window_bounds = array<i64: 1, 128>}, {pipeline_mode = #tpu.pipeline_mode<synchronous>, transform_indices = @transform_5, window_bounds = array<i64: 128, 128>}, {pipeline_mode = #tpu.pipeline_mode<synchronous>, transform_indices = @transform_6, window_bounds = array<i64: 1, 128>}, {transform_indices = @transform_7, window_bounds = array<i64: 8, 128>}]} {
    %c0 = arith.constant 0 : index
    %c0_0 = arith.constant 0 : index
    %0 = vector.load %arg1[%c0, %c0_0] : memref<8x4xf32, #tpu.memory_space<vmem>>, vector<8x4xf32>
    %c0_1 = arith.constant 0 : index
    %c0_2 = arith.constant 0 : index
    %1 = vector.load %arg2[%c0_1, %c0_2] : memref<4x128xf32, #tpu.memory_space<vmem>>, vector<4x128xf32>
    %2 = vector.extract_strided_slice %0 {offsets = [0, 0], sizes = [8, 1], strides = [1, 1]} : vector<8x4xf32> to vector<8x1xf32>
    %3 = vector.extract_strided_slice %1 {offsets = [0, 0], sizes = [1, 128], strides = [1, 1]} : vector<4x128xf32> to vector<1x128xf32>
    %4 = vector.broadcast %2 : vector<8x1xf32> to vector<8x128xf32>
    %5 = vector.broadcast %3 : vector<1x128xf32> to vector<8x128xf32>
    %6 = arith.mulf %4, %5 : vector<8x128xf32>
    %c0_3 = arith.constant 0 : index
    %c0_4 = arith.constant 0 : index
    %7 = vector.load %arg3[%c0_3, %c0_4] : memref<1x128xf32, #tpu.memory_space<vmem>>, vector<1x128xf32>
    %8 = vector.broadcast %7 : vector<1x128xf32> to vector<8x128xf32>
    %9 = arith.addf %6, %8 : vector<8x128xf32>
    %10 = vector.extract_strided_slice %0 {offsets = [0, 1], sizes = [8, 1], strides = [1, 1]} : vector<8x4xf32> to vector<8x1xf32>
    %11 = vector.extract_strided_slice %1 {offsets = [1, 0], sizes = [1, 128], strides = [1, 1]} : vector<4x128xf32> to vector<1x128xf32>
    %12 = vector.broadcast %10 : vector<8x1xf32> to vector<8x128xf32>
    %13 = vector.broadcast %11 : vector<1x128xf32> to vector<8x128xf32>
    %14 = arith.mulf %12, %13 : vector<8x128xf32>
    %15 = arith.addf %9, %14 : vector<8x128xf32>
    %16 = vector.extract_strided_slice %0 {offsets = [0, 2], sizes = [8, 1], strides = [1, 1]} : vector<8x4xf32> to vector<8x1xf32>
    %17 = vector.extract_strided_slice %1 {offsets = [2, 0], sizes = [1, 128], strides = [1, 1]} : vector<4x128xf32> to vector<1x128xf32>
    %18 = vector.broadcast %16 : vector<8x1xf32> to vector<8x128xf32>
    %19 = vector.broadcast %17 : vector<1x128xf32> to vector<8x128xf32>
    %20 = arith.mulf %18, %19 : vector<8x128xf32>
    %21 = arith.addf %15, %20 : vector<8x128xf32>
    %22 = vector.extract_strided_slice %0 {offsets = [0, 3], sizes = [8, 1], strides = [1, 1]} : vector<8x4xf32> to vector<8x1xf32>
    %23 = vector.extract_strided_slice %1 {offsets = [3, 0], sizes = [1, 128], strides = [1, 1]} : vector<4x128xf32> to vector<1x128xf32>
    %24 = vector.broadcast %22 : vector<8x1xf32> to vector<8x128xf32>
    %25 = vector.broadcast %23 : vector<1x128xf32> to vector<8x128xf32>
    %26 = arith.mulf %24, %25 : vector<8x128xf32>
    %27 = arith.addf %21, %26 : vector<8x128xf32>
    %cst = arith.constant 0.000000e+00 : f32
    %28 = vector.broadcast %cst : f32 to vector<8x128xf32>
    %29 = arith.maximumf %27, %28 : vector<8x128xf32>
    %30 = arith.truncf %29 : vector<8x128xf32> to vector<8x128xbf16>
    %c0_5 = arith.constant 0 : index
    %c0_6 = arith.constant 0 : index
    %31 = vector.load %arg4[%c0_5, %c0_6] : memref<128x128xbf16, #tpu.memory_space<vmem>>, vector<128x128xbf16>
    %cst_7 = arith.constant dense<0.000000e+00> : vector<8x128xf32>
    %32 = tpu.matmul %30, %31, %cst_7 {dimension_numbers = #tpu.dot_dimension_numbers<[1], [0], [0], [1], [0, 0, 1, 1], [], []>} : vector<8x128xbf16>, vector<128x128xbf16>, vector<8x128xf32> -> vector<8x128xf32>
    %c0_8 = arith.constant 0 : index
    %c0_9 = arith.constant 0 : index
    %33 = vector.load %arg5[%c0_8, %c0_9] : memref<1x128xf32, #tpu.memory_space<vmem>>, vector<1x128xf32>
    %34 = vector.broadcast %33 : vector<1x128xf32> to vector<8x128xf32>
    %35 = arith.addf %32, %34 : vector<8x128xf32>
    %cst_10 = arith.constant 0.000000e+00 : f32
    %36 = vector.broadcast %cst_10 : f32 to vector<8x128xf32>
    %37 = arith.maximumf %35, %36 : vector<8x128xf32>
    %38 = arith.truncf %37 : vector<8x128xf32> to vector<8x128xbf16>
    %c0_11 = arith.constant 0 : index
    %c0_12 = arith.constant 0 : index
    %39 = vector.load %arg6[%c0_11, %c0_12] : memref<128x128xbf16, #tpu.memory_space<vmem>>, vector<128x128xbf16>
    %cst_13 = arith.constant dense<0.000000e+00> : vector<8x128xf32>
    %40 = tpu.matmul %38, %39, %cst_13 {dimension_numbers = #tpu.dot_dimension_numbers<[1], [0], [0], [1], [0, 0, 1, 1], [], []>} : vector<8x128xbf16>, vector<128x128xbf16>, vector<8x128xf32> -> vector<8x128xf32>
    %c0_14 = arith.constant 0 : index
    %c0_15 = arith.constant 0 : index
    %41 = vector.load %arg7[%c0_14, %c0_15] : memref<1x128xf32, #tpu.memory_space<vmem>>, vector<1x128xf32>
    %42 = vector.broadcast %41 : vector<1x128xf32> to vector<8x128xf32>
    %43 = arith.addf %40, %42 : vector<8x128xf32>
    %c0_16 = arith.constant 0 : index
    %c0_17 = arith.constant 0 : index
    %44 = vector.load %arg8[%c0_16, %c0_17] : memref<8x128xf32, #tpu.memory_space<vmem>>, vector<8x128xf32>
    tpu.vector_store %arg8[%c0_16, %c0_17], %43 {strides = array<i32>} : memref<8x128xf32, #tpu.memory_space<vmem>>, vector<8x128xf32>,
    return
  }
  func.func @transform_0(%arg0: i32) -> (i32, i32) {
    %c0_i32 = arith.constant 0 : i32
    %c0_i32_0 = arith.constant 0 : i32
    return %arg0, %c0_i32 : i32, i32
  }
  func.func @transform_1(%arg0: i32) -> (i32, i32) {
    %c0_i32 = arith.constant 0 : i32
    %c0_i32_0 = arith.constant 0 : i32
    %c0_i32_1 = arith.constant 0 : i32
    return %c0_i32, %c0_i32_0 : i32, i32
  }
  func.func @transform_2(%arg0: i32) -> (i32, i32) {
    %c0_i32 = arith.constant 0 : i32
    %c0_i32_0 = arith.constant 0 : i32
    %c0_i32_1 = arith.constant 0 : i32
    return %c0_i32, %c0_i32_0 : i32, i32
  }
  func.func @transform_3(%arg0: i32) -> (i32, i32) {
    %c0_i32 = arith.constant 0 : i32
    %c0_i32_0 = arith.constant 0 : i32
    %c0_i32_1 = arith.constant 0 : i32
    return %c0_i32, %c0_i32_0 : i32, i32
  }
  func.func @transform_4(%arg0: i32) -> (i32, i32) {
    %c0_i32 = arith.constant 0 : i32
    %c0_i32_0 = arith.constant 0 : i32
    %c0_i32_1 = arith.constant 0 : i32
    return %c0_i32, %c0_i32_0 : i32, i32
  }
  func.func @transform_5(%arg0: i32) -> (i32, i32) {
    %c0_i32 = arith.constant 0 : i32
    %c0_i32_0 = arith.constant 0 : i32
    %c0_i32_1 = arith.constant 0 : i32
    return %c0_i32, %c0_i32_0 : i32, i32
  }
  func.func @transform_6(%arg0: i32) -> (i32, i32) {
    %c0_i32 = arith.constant 0 : i32
    %c0_i32_0 = arith.constant 0 : i32
    %c0_i32_1 = arith.constant 0 : i32
    return %c0_i32, %c0_i32_0 : i32, i32
  }
  func.func @transform_7(%arg0: i32) -> (i32, i32) {
    %c0_i32 = arith.constant 0 : i32
    %c0_i32_0 = arith.constant 0 : i32
    return %arg0, %c0_i32 : i32, i32
  }
}

</mosaic_0001>

<llo_original>
// kernel: tpu_custom_call.1
$region0: #{tpu_custom_call.1}
  #allocation0 [shape = 'u32[]', space=smem, size = 0x4, offset = 0x4, fixed_abs, tag = 'smem constant byte address 0x4 - core index']
  #allocation1 [shape = 'u32[144,128]{1,0:T(1,128)}', space=vmem, size = 0x12000, scoped, tag = 'internal scratch']
  %s0 = inlined_call_operand.vmem [shape: f32[8,4], index: 0, kind: input, shape index: {}]
  %s1 = inlined_call_operand.vmem [shape: f32[4,128], index: 1, kind: input, shape index: {}]
  %s2 = inlined_call_operand.vmem [shape: f32[1,128], index: 2, kind: input, shape index: {}]
  %s3 = inlined_call_operand.hbm [shape: bf16[128,128], index: 3, kind: input, shape index: {}]
  %s4 = inlined_call_operand.vmem [shape: f32[1,128], index: 4, kind: input, shape index: {}]
  %s5 = inlined_call_operand.hbm [shape: bf16[128,128], index: 5, kind: input, shape index: {}]
  %s6 = inlined_call_operand.vmem [shape: f32[1,128], index: 6, kind: input, shape index: {}]
  %s7 = inlined_call_operand.hbm [shape: f32[8,128], index: 7, kind: output, shape index: {}]
  %s8 = sld [smem:[#allocation0]]
  $region46: #{tpu_custom_call.1} parent=0
    _
  %s10 = ssub.s32 1, %s8
  %s11 = scalar_select 0, %s10, %s8
  $region1: #{tpu_custom_call.1} parent=0
    #allocation2 [shape = 'u8[32768]{0}', space=vmem, size = 0x8000, scoped, tag = 'input window, operand 3, single buffered']
    #allocation3 [shape = 's32[1]{0}', space=sflag, size = 0x4, scoped, tag = 'scoped memory for tpu_custom_call.1']
    #allocation4 [shape = 's32[1]{0}', space=sflag, size = 0x4, scoped, tag = 'scoped memory for tpu_custom_call.1']
    #allocation5 [shape = 'u8[32768]{0}', space=vmem, size = 0x8000, scoped, tag = 'input window, operand 5, single buffered']
    #allocation6 [shape = 's32[1]{0}', space=sflag, size = 0x4, scoped, tag = 'scoped memory for tpu_custom_call.1']
    #allocation7 [shape = 'u8[4096]{0}', space=vmem, size = 0x1000, scoped, tag = 'output window, operand 0, single buffered']
    %12 = vsyncpa [#allocation3], 0
    %13 = vsyncpa [#allocation6], 0
    %14 = vsyncpa [#allocation4], 0
    // Predicated region
    $region2: #{tpu_custom_call.1} parent=1 // pred_check
      _
    $region3: #{tpu_custom_call.1} parent=1 // pred_check_branch
      %16 = sbr.rel (0) target = $region5
    $region4: #{tpu_custom_call.1} parent=1 // pred_region
      _
    $region5: #{tpu_custom_call.1} parent=1 // pred_fallthru
      _
    // Predicated region
    $region6: #{tpu_custom_call.1} parent=1 // pred_check
      _
    $region7: #{tpu_custom_call.1} parent=1 // pred_check_branch
      %18 = sbr.rel (0) target = $region9
    $region8: #{tpu_custom_call.1} parent=1 // pred_region
      _
    $region9: #{tpu_custom_call.1} parent=1 // pred_fallthru
      _
    // Predicated region
    $region10: #{tpu_custom_call.1} parent=1 // pred_check
      _
    $region11: #{tpu_custom_call.1} parent=1 // pred_check_branch
      %20 = sbr.rel (0) target = $region13
    $region12: #{tpu_custom_call.1} parent=1 // pred_region
      _
    $region13: #{tpu_custom_call.1} parent=1 // pred_fallthru
      _
    // Predicated region
    $region14: #{tpu_custom_call.1} parent=1 // pred_check
      _
    $region15: #{tpu_custom_call.1} parent=1 // pred_check_branch
      %22 = sbr.rel (0) target = $region17
    $region16: #{tpu_custom_call.1} parent=1 // pred_region
      %s24 = ssub.s32 1024, 1024
      %25 = vsyncadd [#allocation3], %s24
      %s26 = sshll.u32 [#allocation2], 4
      %s27 = int_to_ptr.vmem [resolvable:$true] %s26
      %32 = dma.hbm_to_vmem [thread:$0]  %s3, 1024, %s27, [#allocation3], 64, 64, 4
    $region17: #{tpu_custom_call.1} parent=1 // pred_fallthru
      _
    // Predicated region
    $region18: #{tpu_custom_call.1} parent=1 // pred_check
      _
    $region19: #{tpu_custom_call.1} parent=1 // pred_check_branch
      %34 = sbr.rel (0) target = $region21
    $region20: #{tpu_custom_call.1} parent=1 // pred_region
      _
    $region21: #{tpu_custom_call.1} parent=1 // pred_fallthru
      _
    // Predicated region
    $region22: #{tpu_custom_call.1} parent=1 // pred_check
      _
    $region23: #{tpu_custom_call.1} parent=1 // pred_check_branch
      %36 = sbr.rel (0) target = $region25
    $region24: #{tpu_custom_call.1} parent=1 // pred_region
      %s38 = ssub.s32 1024, 1024
      %39 = vsyncadd [#allocation6], %s38
      %s40 = sshll.u32 [#allocation5], 4
      %s41 = int_to_ptr.vmem [resolvable:$true] %s40
      %46 = dma.hbm_to_vmem [thread:$0]  %s5, 1024, %s41, [#allocation6], 64, 64, 4
    $region25: #{tpu_custom_call.1} parent=1 // pred_fallthru
      _
    // Predicated region
    $region26: #{tpu_custom_call.1} parent=1 // pred_check
      _
    $region27: #{tpu_custom_call.1} parent=1 // pred_check_branch
      %48 = sbr.rel (0) target = $region29
    $region28: #{tpu_custom_call.1} parent=1 // pred_region
      _
    $region29: #{tpu_custom_call.1} parent=1 // pred_fallthru
      _
    // Predicated region
    $region30: #{tpu_custom_call.1} parent=1 // pred_check
      _
    $region31: #{tpu_custom_call.1} parent=1 // pred_check_branch
      %50 = sbr.rel (0) target = $region33
    $region32: #{tpu_custom_call.1} parent=1 // pred_region
      %51 = dma.done [#allocation3], 1024
    $region33: #{tpu_custom_call.1} parent=1 // pred_fallthru
      _
    // Predicated region
    $region34: #{tpu_custom_call.1} parent=1 // pred_check
      _
    $region35: #{tpu_custom_call.1} parent=1 // pred_check_branch
      %53 = sbr.rel (0) target = $region37
    $region36: #{tpu_custom_call.1} parent=1 // pred_region
      %54 = dma.done [#allocation6], 1024
    $region37: #{tpu_custom_call.1} parent=1 // pred_fallthru
      _
    %v56 = vld [vmem:[%s0] sm:$0xff]
    %v57 = vld [vmem:[%s1] sm:$0xf]
    %59 = vset.pattern.permute.xlu0 0
    %60 = vperm.xlu0 %59, %v56
    %v61 = vpop.permute.xlu0 %60
    %v63 = vlaneseq
    %v64 = vshrl.u32 %v63, 7
    %v65 = vsub.s32 0, %v64
    %v66 = vrot.slane %v57, %v65
    %v67 = vmul.f32 %v61, %v66
    %v68 = vld [vmem:[%s2] sm:$0x1]
    %v70 = vlaneseq
    %v71 = vshrl.u32 %v70, 7
    %v72 = vsub.s32 0, %v71
    %v73 = vrot.slane %v68, %v72
    %v75 = vadd.f32 %v67, %v73
    %76 = vset.pattern.permute.xlu0 1
    %77 = vperm.xlu0 %76, %v56
    %v78 = vpop.permute.xlu0 %77
    %v80 = vlaneseq
    %v81 = vshrl.u32 %v80, 7
    %v82 = vsub.s32 1, %v81
    %v83 = vrot.slane %v57, %v82
    %v84 = vmul.f32 %v78, %v83
    %v85 = vadd.f32 %v75, %v84
    %86 = vset.pattern.permute.xlu0 2
    %87 = vperm.xlu0 %86, %v56
    %v88 = vpop.permute.xlu0 %87
    %v90 = vlaneseq
    %v91 = vshrl.u32 %v90, 7
    %v92 = vsub.s32 2, %v91
    %v93 = vrot.slane %v57, %v92
    %v94 = vmul.f32 %v88, %v93
    %v95 = vadd.f32 %v85, %v94
    %96 = vset.pattern.permute.xlu0 3
    %97 = vperm.xlu0 %96, %v56
    %v98 = vpop.permute.xlu0 %97
    %v100 = vlaneseq
    %v101 = vshrl.u32 %v100, 7
    %v102 = vsub.s32 3, %v101
    %v103 = vrot.slane %v57, %v102
    %v104 = vmul.f32 %v98, %v103
    %v105 = vadd.f32 %v95, %v104
    %v106 = vmax.f32 %v105, 0.0
    %v107 = vpack.c.bf16 %v106, %v106
    %v108 = vld [vmem:[#allocation2] sm:$0xf]
    %v109 = vld [vmem:[#allocation2 + $0x4] sm:$0xf]
    %v110 = vld [vmem:[#allocation2 + $0x8] sm:$0xf]
    %v111 = vld [vmem:[#allocation2 + $0xc] sm:$0xf]
    %v112 = vld [vmem:[#allocation2 + $0x10] sm:$0xf]
    %v113 = vld [vmem:[#allocation2 + $0x14] sm:$0xf]
    %v114 = vld [vmem:[#allocation2 + $0x18] sm:$0xf]
    %v115 = vld [vmem:[#allocation2 + $0x1c] sm:$0xf]
    %v116 = vld [vmem:[#allocation2 + $0x20] sm:$0xf]
    %v117 = vld [vmem:[#allocation2 + $0x24] sm:$0xf]
    %v118 = vld [vmem:[#allocation2 + $0x28] sm:$0xf]
    %v119 = vld [vmem:[#allocation2 + $0x2c] sm:$0xf]
    %v120 = vld [vmem:[#allocation2 + $0x30] sm:$0xf]
    %v121 = vld [vmem:[#allocation2 + $0x34] sm:$0xf]
    %v122 = vld [vmem:[#allocation2 + $0x38] sm:$0xf]
    %v123 = vld [vmem:[#allocation2 + $0x3c] sm:$0xf]
    %v124 = vld [vmem:[%s4] sm:$0x1]
    %v126 = vlaneseq
    %v127 = vshrl.u32 %v126, 7
    %v128 = vsub.s32 0, %v127
    %v129 = vrot.slane %v124, %v128
    %v147 = vunpack.c.l.b16 %v108
    %v148 = vunpack.c.l.b16 %v109
    %v149 = vunpack.c.l.b16 %v110
    %v150 = vunpack.c.l.b16 %v111
    %v151 = vunpack.c.l.b16 %v112
    %v152 = vunpack.c.l.b16 %v113
    %v153 = vunpack.c.l.b16 %v114
    %v154 = vunpack.c.l.b16 %v115
    %v155 = vunpack.c.l.b16 %v116
    %v156 = vunpack.c.l.b16 %v117
    %v157 = vunpack.c.l.b16 %v118
    %v158 = vunpack.c.l.b16 %v119
    %v159 = vunpack.c.l.b16 %v120
    %v160 = vunpack.c.l.b16 %v121
    %v161 = vunpack.c.l.b16 %v122
    %v162 = vunpack.c.l.b16 %v123
    %v163 = vpack.c.b16 %v148, %v147
    %v164 = vpack.c.b16 %v150, %v149
    %v165 = vpack.c.b16 %v152, %v151
    %v166 = vpack.c.b16 %v154, %v153
    %v167 = vpack.c.b16 %v156, %v155
    %v168 = vpack.c.b16 %v158, %v157
    %v169 = vpack.c.b16 %v160, %v159
    %v170 = vpack.c.b16 %v162, %v161
    %179 = vmatprep.subr.bf16.mxu0 0
    %180 = vmatpush1.bf16.msra.mxu0 %v170
    %181 = vmatprep.subr.bf16.mxu0 0
    %182 = vmatpush1.bf16.msra.mxu0 %v169
    %183 = vmatprep.subr.bf16.mxu0 0
    %184 = vmatpush1.bf16.msra.mxu0 %v168
    %185 = vmatprep.subr.bf16.mxu0 0
    %186 = vmatpush1.bf16.msra.mxu0 %v167
    %187 = vmatprep.subr.bf16.mxu0 0
    %188 = vmatpush1.bf16.msra.mxu0 %v166
    %189 = vmatprep.subr.bf16.mxu0 0
    %190 = vmatpush1.bf16.msra.mxu0 %v165
    %191 = vmatprep.subr.bf16.mxu0 0
    %192 = vmatpush1.bf16.msra.mxu0 %v164
    %193 = vmatprep.subr.bf16.mxu0 0
    %194 = vmatpush1.bf16.msra.mxu0 %v163
    %195 = vmatprep.subr.bf16.mxu0 0
    %196 = vmatpush2.bf16.msra.mxu0 0
    %197 = vmatprep.subr.bf16.mxu0 0
    %198 = vmatpush2.bf16.msra.mxu0 0
    %199 = vmatprep.subr.bf16.mxu0 0
    %200 = vmatpush2.bf16.msra.mxu0 0
    %201 = vmatprep.subr.bf16.mxu0 0
    %202 = vmatpush2.bf16.msra.mxu0 0
    %203 = vmatprep.subr.bf16.mxu0 0
    %204 = vmatpush2.bf16.msra.mxu0 0
    %205 = vmatprep.subr.bf16.mxu0 0
    %206 = vmatpush2.bf16.msra.mxu0 0
    %207 = vmatprep.subr.bf16.mxu0 0
    %208 = vmatpush2.bf16.msra.mxu0 0
    %209 = vmatprep.subr.bf16.mxu0 0
    %210 = vmatpush2.bf16.msra.mxu0 0
    %211 = vmatprep.mubr.bf16.mxu0 0
    %212 = vmatmul.mubr.bf16.gmra.mxu0 %v107
    %v213 = vpop.f32.mrf.mxu0
    %v214 = vadd.f32 %v129, %v213
    %v215 = vpop.f32.mrf.mxu0
    %v216 = vpop.f32.mrf.mxu0
    %v217 = vpop.f32.mrf.mxu0
    %218 = vdwg.mxu0
    %v219 = vmax.f32 %v214, 0.0
    %v220 = vpack.c.bf16 %v219, %v219
    %v221 = vld [vmem:[#allocation5] sm:$0xf]
    %v222 = vld [vmem:[#allocation5 + $0x4] sm:$0xf]
    %v223 = vld [vmem:[#allocation5 + $0x8] sm:$0xf]
    %v224 = vld [vmem:[#allocation5 + $0xc] sm:$0xf]
    %v225 = vld [vmem:[#allocation5 + $0x10] sm:$0xf]
    %v226 = vld [vmem:[#allocation5 + $0x14] sm:$0xf]
    %v227 = vld [vmem:[#allocation5 + $0x18] sm:$0xf]
    %v228 = vld [vmem:[#allocation5 + $0x1c] sm:$0xf]
    %v229 = vld [vmem:[#allocation5 + $0x20] sm:$0xf]
    %v230 = vld [vmem:[#allocation5 + $0x24] sm:$0xf]
    %v231 = vld [vmem:[#allocation5 + $0x28] sm:$0xf]
    %v232 = vld [vmem:[#allocation5 + $0x2c] sm:$0xf]
    %v233 = vld [vmem:[#allocation5 + $0x30] sm:$0xf]
    %v234 = vld [vmem:[#allocation5 + $0x34] sm:$0xf]
    %v235 = vld [vmem:[#allocation5 + $0x38] sm:$0xf]
    %v236 = vld [vmem:[#allocation5 + $0x3c] sm:$0xf]
    %v237 = vld [vmem:[%s6] sm:$0x1]
    %v239 = vlaneseq
    %v240 = vshrl.u32 %v239, 7
    %v241 = vsub.s32 0, %v240
    %v242 = vrot.slane %v237, %v241
    %v260 = vunpack.c.l.b16 %v221
    %v261 = vunpack.c.l.b16 %v222
    %v262 = vunpack.c.l.b16 %v223
    %v263 = vunpack.c.l.b16 %v224
    %v264 = vunpack.c.l.b16 %v225
    %v265 = vunpack.c.l.b16 %v226
    %v266 = vunpack.c.l.b16 %v227
    %v267 = vunpack.c.l.b16 %v228
    %v268 = vunpack.c.l.b16 %v229
    %v269 = vunpack.c.l.b16 %v230
    %v270 = vunpack.c.l.b16 %v231
    %v271 = vunpack.c.l.b16 %v232
    %v272 = vunpack.c.l.b16 %v233
    %v273 = vunpack.c.l.b16 %v234
    %v274 = vunpack.c.l.b16 %v235
    %v275 = vunpack.c.l.b16 %v236
    %v276 = vpack.c.b16 %v261, %v260
    %v277 = vpack.c.b16 %v263, %v262
    %v278 = vpack.c.b16 %v265, %v264
    %v279 = vpack.c.b16 %v267, %v266
    %v280 = vpack.c.b16 %v269, %v268
    %v281 = vpack.c.b16 %v271, %v270
    %v282 = vpack.c.b16 %v273, %v272
    %v283 = vpack.c.b16 %v275, %v274
    %292 = vmatprep.subr.bf16.mxu0 0
    %293 = vmatpush1.bf16.msra.mxu0 %v283
    %294 = vmatprep.subr.bf16.mxu0 0
    %295 = vmatpush1.bf16.msra.mxu0 %v282
    %296 = vmatprep.subr.bf16.mxu0 0
    %297 = vmatpush1.bf16.msra.mxu0 %v281
    %298 = vmatprep.subr.bf16.mxu0 0
    %299 = vmatpush1.bf16.msra.mxu0 %v280
    %300 = vmatprep.subr.bf16.mxu0 0
    %301 = vmatpush1.bf16.msra.mxu0 %v279
    %302 = vmatprep.subr.bf16.mxu0 0
    %303 = vmatpush1.bf16.msra.mxu0 %v278
    %304 = vmatprep.subr.bf16.mxu0 0
    %305 = vmatpush1.bf16.msra.mxu0 %v277
    %306 = vmatprep.subr.bf16.mxu0 0
    %307 = vmatpush1.bf16.msra.mxu0 %v276
    %308 = vmatprep.subr.bf16.mxu0 0
    %309 = vmatpush2.bf16.msra.mxu0 0
    %310 = vmatprep.subr.bf16.mxu0 0
    %311 = vmatpush2.bf16.msra.mxu0 0
    %312 = vmatprep.subr.bf16.mxu0 0
    %313 = vmatpush2.bf16.msra.mxu0 0
    %314 = vmatprep.subr.bf16.mxu0 0
    %315 = vmatpush2.bf16.msra.mxu0 0
    %316 = vmatprep.subr.bf16.mxu0 0
    %317 = vmatpush2.bf16.msra.mxu0 0
    %318 = vmatprep.subr.bf16.mxu0 0
    %319 = vmatpush2.bf16.msra.mxu0 0
    %320 = vmatprep.subr.bf16.mxu0 0
    %321 = vmatpush2.bf16.msra.mxu0 0
    %322 = vmatprep.subr.bf16.mxu0 0
    %323 = vmatpush2.bf16.msra.mxu0 0
    %324 = vmatprep.mubr.bf16.mxu0 0
    %325 = vmatmul.mubr.bf16.gmra.mxu0 %v220
    %v326 = vpop.f32.mrf.mxu0
    %v327 = vadd.f32 %v242, %v326
    %v328 = vpop.f32.mrf.mxu0
    %v329 = vpop.f32.mrf.mxu0
    %v330 = vpop.f32.mrf.mxu0
    %331 = vdwg.mxu0
    %332 = vst [vmem:[#allocation7] sm:$0xff] %v327
    // Predicated region
    $region38: #{tpu_custom_call.1} parent=1 // pred_check
      _
    $region39: #{tpu_custom_call.1} parent=1 // pred_check_branch
      %334 = sbr.rel (0) target = $region41
    $region40: #{tpu_custom_call.1} parent=1 // pred_region
      %s336 = ssub.s32 128, 128
      %337 = vsyncadd [#allocation4], %s336
      %s339 = sshll.u32 [#allocation7], 4
      %s340 = int_to_ptr.vmem [resolvable:$true] %s339
      %342 = dma.vmem_to_hbm [thread:$0]  %s340, 128, %s7, [#allocation4]
    $region41: #{tpu_custom_call.1} parent=1 // pred_fallthru
      _
    // Predicated region
    $region42: #{tpu_custom_call.1} parent=1 // pred_check
      _
    $region43: #{tpu_custom_call.1} parent=1 // pred_check_branch
      %344 = sbr.rel (0) target = $region45
    $region44: #{tpu_custom_call.1} parent=1 // pred_region
      %345 = dma.done [#allocation4], 128
    $region45: #{tpu_custom_call.1} parent=1 // pred_fallthru
      _
    %346 = vsyncpa [#allocation3], 1
    %347 = vsyncpa [#allocation6], 1
    %348 = vsyncpa [#allocation4], 1

</llo_original>
